<compile_context>
chip_gen: v7x
topology: tpu7x:2x2x1
jax: 0.10.0
libtpu: 0.0.40
codegen_flags: <defaults>
</compile_context>

<pallas_src>
import functools
import math

import jax
import jax.numpy as jnp
from jax.experimental import pallas as pl
from jax.experimental.pallas import tpu as pltpu


# ---------------------------------------------------------------------------
# Pass 1: fused QKV projection (one streaming pass over x), Q pre-scaled.
# ---------------------------------------------------------------------------
def _qkv_proj_kernel(scale, x_ref, wq_ref, wk_ref, wv_ref, q_ref, k_ref, v_ref):
    Bt, T, d_in = x_ref.shape
    d_out = wq_ref.shape[1]
    x2 = x_ref[...].reshape(Bt * T, d_in)
    q = jnp.dot(x2, wq_ref[...], preferred_element_type=jnp.float32) * scale
    k = jnp.dot(x2, wk_ref[...], preferred_element_type=jnp.float32)
    v = jnp.dot(x2, wv_ref[...], preferred_element_type=jnp.float32)
    q_ref[...] = q.reshape(Bt, T, d_out).astype(q_ref.dtype)
    k_ref[...] = k.reshape(Bt, T, d_out).astype(k_ref.dtype)
    v_ref[...] = v.reshape(Bt, T, d_out).astype(v_ref.dtype)


# ---------------------------------------------------------------------------
# Pass 2: flash-style K-tiled causal attention with online softmax.
# ---------------------------------------------------------------------------
def _flash_causal_kernel(q_ref, k_ref, v_ref, o_ref, m_ref, l_ref, acc_ref):
    Bt, TQ, d_out = q_ref.shape
    TK = k_ref.shape[1]

    qi = pl.program_id(1)
    ki = pl.program_id(2)

    @pl.when(ki == 0)
    def _init():
        m_ref[...] = jnp.full(m_ref.shape, -jnp.inf, jnp.float32)
        l_ref[...] = jnp.zeros(l_ref.shape, jnp.float32)
        acc_ref[...] = jnp.zeros(acc_ref.shape, jnp.float32)

    q_start = qi * TQ
    k_start = ki * TK

    # Tile is needed iff it contains at least one (k_pos <= q_pos) pair.
    needed = k_start <= q_start + TQ - 1
    # Tile is fully in the past (no masking required) iff its last key
    # position does not exceed the first query position of this q-tile.
    fully_past = k_start + TK - 1 <= q_start

    def _update(apply_mask):
        # Scores; queries were pre-scaled in the projection pass.
        s = jnp.einsum('bqe,bke->bqk', q_ref[...], k_ref[...],
                       preferred_element_type=jnp.float32)
        if apply_mask:
            q_pos = q_start + jax.lax.broadcasted_iota(jnp.int32, (TQ, TK), 0)
            k_pos = k_start + jax.lax.broadcasted_iota(jnp.int32, (TQ, TK), 1)
            s = jnp.where((k_pos <= q_pos)[None, :, :], s, -jnp.inf)

        # Online softmax update.  ki==0 is never skipped and its diagonal tile
        # always has >=1 unmasked key per row, so m stays finite and l > 0.
        m_new = jnp.maximum(m_ref[...], s.max(axis=-1, keepdims=True))
        alpha = jnp.exp(m_ref[...] - m_new)
        p = jnp.exp(s - m_new)
        l_ref[...] = alpha * l_ref[...] + p.sum(axis=-1, keepdims=True)
        acc_ref[...] = alpha * acc_ref[...] + jnp.einsum(
            'bqk,bke->bqe', p.astype(v_ref.dtype), v_ref[...],
            preferred_element_type=jnp.float32)
        m_ref[...] = m_new

    # Fully-past tile: skip the mask iotas / compare / where entirely.
    @pl.when(jnp.logical_and(needed, fully_past))
    def _unmasked():
        _update(apply_mask=False)

    # Diagonal (partially masked) tile: apply the causal mask.
    @pl.when(jnp.logical_and(needed, jnp.logical_not(fully_past)))
    def _masked():
        _update(apply_mask=True)

    @pl.when(ki == pl.num_programs(2) - 1)
    def _finalize():
        inv_l = pl.reciprocal(l_ref[...], approx=False)
        o_ref[...] = (acc_ref[...] * inv_l).astype(o_ref.dtype)


# ---------------------------------------------------------------------------
# Wrapper
# ---------------------------------------------------------------------------
def causal_attention(x, wq_t, wk_t, wv_t, *,
                     block_q=256, block_k=256, block_b=8,
                     qkv_dtype=None, megacore_batch=False):
    """Fused causal attention: QKV projection + masked online softmax + PV.

    x: (B, S, d_in); wq_t/wk_t/wv_t: (d_in, d_out) (= nn.Linear weight.T).
    Returns (B, S, d_out) in x.dtype.

    qkv_dtype=jnp.bfloat16 -> bf16-native MXU path on v6e/v7x (f32 accum).
    megacore_batch=True    -> pltpu.CORE_PARALLEL on the batch axis (v7x 2 TCs;
                              only useful when B // block_b >= 2).
    On v5e prefer block_k=128 (128-wide MXU, single vst slot).
    """
    B, S, d_in = x.shape
    d_out = wq_t.shape[1]
    scale = 1.0 / math.sqrt(d_out)
    qkv_dtype = x.dtype if qkv_dtype is None else qkv_dtype

    TQ = min(block_q, S)
    TK = min(block_k, S)
    Bt = min(block_b, B)
    assert S % TQ == 0 and S % TK == 0, "seq len must divide tile sizes"
    assert B % Bt == 0, "batch must divide batch block"

    nb, nq, nk = B // Bt, S // TQ, S // TK

    # ---- Pass 1: QKV projection, once per token (not per q-tile). ----------
    Tp = TQ
    q, k, v = pl.pallas_call(
        functools.partial(_qkv_proj_kernel, scale),
        out_shape=(jax.ShapeDtypeStruct((B, S, d_out), qkv_dtype),) * 3,
        grid_spec=pltpu.PrefetchScalarGridSpec(
            num_scalar_prefetch=0,
            grid=(nb, S // Tp),
            in_specs=[
                pl.BlockSpec((Bt, Tp, d_in), lambda b, t: (b, t, 0)),
                pl.BlockSpec((d_in, d_out), lambda b, t: (0, 0)),
                pl.BlockSpec((d_in, d_out), lambda b, t: (0, 0)),
                pl.BlockSpec((d_in, d_out), lambda b, t: (0, 0)),
            ],
            out_specs=[pl.BlockSpec((Bt, Tp, d_out), lambda b, t: (b, t, 0))] * 3,
        ),
        compiler_params=pltpu.CompilerParams(
            dimension_semantics=("parallel", "parallel")),
    )(x, wq_t, wk_t, wv_t)

    # ---- Pass 2: flash-style causal attention. ------------------------------
    # Clamp the K/V block index to the last causally-needed block for this
    # q-tile: skipped steps repeat the previous block index, so Pallas elides
    # the DMA for fully-masked K tiles (compute is skipped by pl.when).
    def kv_index(b, qi, ki):
        return (b, jnp.minimum(ki, ((qi + 1) * TQ - 1) // TK), 0)

    batch_sem = pltpu.CORE_PARALLEL if megacore_batch else "parallel"

    out = pl.pallas_call(
        _flash_causal_kernel,
        out_shape=jax.ShapeDtypeStruct((B, S, d_out), x.dtype),
        grid_spec=pltpu.PrefetchScalarGridSpec(
            num_scalar_prefetch=0,
            grid=(nb, nq, nk),
            in_specs=[
                pl.BlockSpec((Bt, TQ, d_out), lambda b, qi, ki: (b, qi, 0)),
                pl.BlockSpec((Bt, TK, d_out), kv_index),
                pl.BlockSpec((Bt, TK, d_out), kv_index),
            ],
            out_specs=pl.BlockSpec((Bt, TQ, d_out), lambda b, qi, ki: (b, qi, 0)),
            scratch_shapes=[
                pltpu.VMEM((Bt, TQ, 1), jnp.float32),      # running max m
                pltpu.VMEM((Bt, TQ, 1), jnp.float32),      # running denom l
                pltpu.VMEM((Bt, TQ, d_out), jnp.float32),  # running numerator
            ],
        ),
        compiler_params=pltpu.CompilerParams(
            dimension_semantics=(batch_sem, "parallel", "arbitrary"),
            vmem_limit_bytes=48 * 1024 * 1024),
    )(q, k, v)
    return out


# ---------------------------------------------------------------------------
# Pure-JAX reference mirroring the PyTorch CausalAttention.forward.
# ---------------------------------------------------------------------------
def causal_attention_ref(x, wq_t, wk_t, wv_t):
    d_out = wq_t.shape[1]
    scale = 1.0 / math.sqrt(d_out)
    q = x @ wq_t
    k = x @ wk_t
    v = x @ wv_t
    s = jnp.einsum('bqd,bkd->bqk', q, k) * scale
    S = x.shape[1]
    causal = jnp.triu(jnp.ones((S, S), dtype=bool), k=1)   # True above diagonal
    s = jnp.where(causal[None, :, :], -jnp.inf, s)
    p = jax.nn.softmax(s, axis=-1)
    return jnp.einsum('bqk,bkv->bqv', p, v)


if __name__ == "__main__":
    # Small shapes consistent with the module: batch=2, seq=8, d_in=32, d_out=16.
    B, S, d_in, d_out = 2, 8, 32, 16

    root = jax.random.PRNGKey(0)
    kx, kwq, kwk, kwv = jax.random.split(root, 4)

    x = jax.random.normal(kx, (B, S, d_in), jnp.float32)

    # Deterministic nn.Linear-style uniform init, stored transposed (W.T).
    def linear_init(key, fan_in, fan_out):
        bound = 1.0 / math.sqrt(fan_in)
        return jax.random.uniform(key, (fan_in, fan_out), jnp.float32,
                                  minval=-bound, maxval=bound)

    wq_t = linear_init(kwq, d_in, d_out)
    wk_t = linear_init(kwk, d_in, d_out)
    wv_t = linear_init(kwv, d_in, d_out)

    out = causal_attention(x, wq_t, wk_t, wv_t)
    out = jax.block_until_ready(out)

    ref = causal_attention_ref(x, wq_t, wk_t, wv_t)
    assert out.shape == (B, S, d_out)
    assert jnp.allclose(out, ref, atol=1e-4, rtol=1e-4), "mismatch vs reference"

    print("KERNEL_OK")
</pallas_src>

<mosaic_0001>
module attributes {stable_mosaic.version = 11 : i64} {
  func.func @_qkv_proj_kernel(%arg0: i32, %arg1: i32, %arg2: memref<2x8x32xf32, #tpu.memory_space<vmem>>, %arg3: memref<32x16xf32, #tpu.memory_space<vmem>>, %arg4: memref<32x16xf32, #tpu.memory_space<vmem>>, %arg5: memref<32x16xf32, #tpu.memory_space<vmem>>, %arg6: memref<2x8x16xf32, #tpu.memory_space<vmem>>, %arg7: memref<2x8x16xf32, #tpu.memory_space<vmem>>, %arg8: memref<2x8x16xf32, #tpu.memory_space<vmem>>) attributes {dimension_semantics = [#tpu.dimension_semantics<parallel>, #tpu.dimension_semantics<parallel>], iteration_bounds = array<i64: 1, 1>, scalar_prefetch = 0 : i64, scratch_operands = 0 : i64, tpu.core_type = #tpu.core_type<tc>, window_params = [{transform_indices = @transform_0, window_bounds = array<i64: 2, 8, 32>}, {pipeline_mode = #tpu.pipeline_mode<synchronous>, transform_indices = @transform_1, window_bounds = array<i64: 32, 16>}, {pipeline_mode = #tpu.pipeline_mode<synchronous>, transform_indices = @transform_2, window_bounds = array<i64: 32, 16>}, {pipeline_mode = #tpu.pipeline_mode<synchronous>, transform_indices = @transform_3, window_bounds = array<i64: 32, 16>}, {transform_indices = @transform_4, window_bounds = array<i64: 2, 8, 16>}, {transform_indices = @transform_5, window_bounds = array<i64: 2, 8, 16>}, {transform_indices = @transform_6, window_bounds = array<i64: 2, 8, 16>}]} {
    %c0 = arith.constant 0 : index
    %c0_0 = arith.constant 0 : index
    %c0_1 = arith.constant 0 : index
    %0 = vector.load %arg2[%c0, %c0_0, %c0_1] : memref<2x8x32xf32, #tpu.memory_space<vmem>>, vector<2x8x32xf32>
    %1 = vector.shape_cast %0 : vector<2x8x32xf32> to vector<16x32xf32>
    %c0_2 = arith.constant 0 : index
    %c0_3 = arith.constant 0 : index
    %2 = vector.load %arg3[%c0_2, %c0_3] : memref<32x16xf32, #tpu.memory_space<vmem>>, vector<32x16xf32>
    %cst = arith.constant dense<0.000000e+00> : vector<16x16xf32>
    %3 = tpu.matmul %1, %2, %cst {dimension_numbers = #tpu.dot_dimension_numbers<[1], [0], [0], [1], [0, 0, 1, 1], [], []>} : vector<16x32xf32>, vector<32x16xf32>, vector<16x16xf32> -> vector<16x16xf32>
    %cst_4 = arith.constant 2.500000e-01 : f32
    %4 = vector.broadcast %cst_4 : f32 to vector<16x16xf32>
    %5 = arith.mulf %3, %4 : vector<16x16xf32>
    %c0_5 = arith.constant 0 : index
    %c0_6 = arith.constant 0 : index
    %6 = vector.load %arg4[%c0_5, %c0_6] : memref<32x16xf32, #tpu.memory_space<vmem>>, vector<32x16xf32>
    %cst_7 = arith.constant dense<0.000000e+00> : vector<16x16xf32>
    %7 = tpu.matmul %1, %6, %cst_7 {dimension_numbers = #tpu.dot_dimension_numbers<[1], [0], [0], [1], [0, 0, 1, 1], [], []>} : vector<16x32xf32>, vector<32x16xf32>, vector<16x16xf32> -> vector<16x16xf32>
    %c0_8 = arith.constant 0 : index
    %c0_9 = arith.constant 0 : index
    %8 = vector.load %arg5[%c0_8, %c0_9] : memref<32x16xf32, #tpu.memory_space<vmem>>, vector<32x16xf32>
    %cst_10 = arith.constant dense<0.000000e+00> : vector<16x16xf32>
    %9 = tpu.matmul %1, %8, %cst_10 {dimension_numbers = #tpu.dot_dimension_numbers<[1], [0], [0], [1], [0, 0, 1, 1], [], []>} : vector<16x32xf32>, vector<32x16xf32>, vector<16x16xf32> -> vector<16x16xf32>
    %10 = vector.shape_cast %5 : vector<16x16xf32> to vector<2x8x16xf32>
    %c0_11 = arith.constant 0 : index
    %c0_12 = arith.constant 0 : index
    %c0_13 = arith.constant 0 : index
    %11 = vector.load %arg6[%c0_11, %c0_12, %c0_13] : memref<2x8x16xf32, #tpu.memory_space<vmem>>, vector<2x8x16xf32>
    tpu.vector_store %arg6[%c0_11, %c0_12, %c0_13], %10 {strides = array<i32>} : memref<2x8x16xf32, #tpu.memory_space<vmem>>, vector<2x8x16xf32>,
    %12 = vector.shape_cast %7 : vector<16x16xf32> to vector<2x8x16xf32>
    %c0_14 = arith.constant 0 : index
    %c0_15 = arith.constant 0 : index
    %c0_16 = arith.constant 0 : index
    %13 = vector.load %arg7[%c0_14, %c0_15, %c0_16] : memref<2x8x16xf32, #tpu.memory_space<vmem>>, vector<2x8x16xf32>
    tpu.vector_store %arg7[%c0_14, %c0_15, %c0_16], %12 {strides = array<i32>} : memref<2x8x16xf32, #tpu.memory_space<vmem>>, vector<2x8x16xf32>,
    %14 = vector.shape_cast %9 : vector<16x16xf32> to vector<2x8x16xf32>
    %c0_17 = arith.constant 0 : index
    %c0_18 = arith.constant 0 : index
    %c0_19 = arith.constant 0 : index
    %15 = vector.load %arg8[%c0_17, %c0_18, %c0_19] : memref<2x8x16xf32, #tpu.memory_space<vmem>>, vector<2x8x16xf32>
    tpu.vector_store %arg8[%c0_17, %c0_18, %c0_19], %14 {strides = array<i32>} : memref<2x8x16xf32, #tpu.memory_space<vmem>>, vector<2x8x16xf32>,
    return
  }
  func.func @transform_0(%arg0: i32, %arg1: i32) -> (i32, i32, i32) {
    %c0_i32 = arith.constant 0 : i32
    %c0_i32_0 = arith.constant 0 : i32
    return %arg0, %arg1, %c0_i32 : i32, i32, i32
  }
  func.func @transform_1(%arg0: i32, %arg1: i32) -> (i32, i32) {
    %c0_i32 = arith.constant 0 : i32
    %c0_i32_0 = arith.constant 0 : i32
    %c0_i32_1 = arith.constant 0 : i32
    return %c0_i32, %c0_i32_0 : i32, i32
  }
  func.func @transform_2(%arg0: i32, %arg1: i32) -> (i32, i32) {
    %c0_i32 = arith.constant 0 : i32
    %c0_i32_0 = arith.constant 0 : i32
    %c0_i32_1 = arith.constant 0 : i32
    return %c0_i32, %c0_i32_0 : i32, i32
  }
  func.func @transform_3(%arg0: i32, %arg1: i32) -> (i32, i32) {
    %c0_i32 = arith.constant 0 : i32
    %c0_i32_0 = arith.constant 0 : i32
    %c0_i32_1 = arith.constant 0 : i32
    return %c0_i32, %c0_i32_0 : i32, i32
  }
  func.func @transform_4(%arg0: i32, %arg1: i32) -> (i32, i32, i32) {
    %c0_i32 = arith.constant 0 : i32
    %c0_i32_0 = arith.constant 0 : i32
    return %arg0, %arg1, %c0_i32 : i32, i32, i32
  }
  func.func @transform_5(%arg0: i32, %arg1: i32) -> (i32, i32, i32) {
    %c0_i32 = arith.constant 0 : i32
    %c0_i32_0 = arith.constant 0 : i32
    return %arg0, %arg1, %c0_i32 : i32, i32, i32
  }
  func.func @transform_6(%arg0: i32, %arg1: i32) -> (i32, i32, i32) {
    %c0_i32 = arith.constant 0 : i32
    %c0_i32_0 = arith.constant 0 : i32
    return %arg0, %arg1, %c0_i32 : i32, i32, i32
  }
}

</mosaic_0001>

<llo_original>
// kernel: tpu_custom_call.1
$region0: #{tpu_custom_call.1}
  #allocation0 [shape = 'u32[]', space=smem, size = 0x4, offset = 0x4, fixed_abs, tag = 'smem constant byte address 0x4 - core index']
  #allocation1 [shape = 'u32[144,128]{1,0:T(1,128)}', space=vmem, size = 0x12000, scoped, tag = 'internal scratch']
  %s0 = inlined_call_operand.vmem [shape: f32[2,8,32], index: 0, kind: input, shape index: {}]
  %s1 = inlined_call_operand.vmem [shape: f32[32,16], index: 1, kind: input, shape index: {}]
  %s2 = inlined_call_operand.vmem [shape: f32[32,16], index: 2, kind: input, shape index: {}]
  %s3 = inlined_call_operand.vmem [shape: f32[32,16], index: 3, kind: input, shape index: {}]
  %s4 = inlined_call_operand.hbm [shape: f32[2,8,16], index: 4, kind: output, shape index: {0}]
  %s5 = inlined_call_operand.hbm [shape: f32[2,8,16], index: 5, kind: output, shape index: {1}]
  %s6 = inlined_call_operand.hbm [shape: f32[2,8,16], index: 6, kind: output, shape index: {2}]
  %7 = xla_tuple %s4, %s5, %s6
  %s8 = sld [smem:[#allocation0]]
  $region42: #{tpu_custom_call.1} parent=0
    _
  %s10 = ssub.s32 1, %s8
  %s11 = scalar_select 0, %s10, %s8
  $region1: #{tpu_custom_call.1} parent=0
    #allocation2 [shape = 'u8[8192]{0}', space=vmem, size = 0x2000, scoped, tag = 'output window, operand 0, single buffered']
    #allocation3 [shape = 's32[1]{0}', space=sflag, size = 0x4, scoped, tag = 'scoped memory for tpu_custom_call.1']
    #allocation4 [shape = 'u8[8192]{0}', space=vmem, size = 0x2000, scoped, tag = 'output window, operand 1, single buffered']
    #allocation5 [shape = 's32[1]{0}', space=sflag, size = 0x4, scoped, tag = 'scoped memory for tpu_custom_call.1']
    #allocation6 [shape = 'u8[8192]{0}', space=vmem, size = 0x2000, scoped, tag = 'output window, operand 2, single buffered']
    %12 = vsyncpa [#allocation3], 0
    %13 = vsyncpa [#allocation5], 0
    // Predicated region
    $region2: #{tpu_custom_call.1} parent=1 // pred_check
      _
    $region3: #{tpu_custom_call.1} parent=1 // pred_check_branch
      %15 = sbr.rel (0) target = $region5
    $region4: #{tpu_custom_call.1} parent=1 // pred_region
      _
    $region5: #{tpu_custom_call.1} parent=1 // pred_fallthru
      _
    // Predicated region
    $region6: #{tpu_custom_call.1} parent=1 // pred_check
      _
    $region7: #{tpu_custom_call.1} parent=1 // pred_check_branch
      %17 = sbr.rel (0) target = $region9
    $region8: #{tpu_custom_call.1} parent=1 // pred_region
      _
    $region9: #{tpu_custom_call.1} parent=1 // pred_fallthru
      _
    // Predicated region
    $region10: #{tpu_custom_call.1} parent=1 // pred_check
      _
    $region11: #{tpu_custom_call.1} parent=1 // pred_check_branch
      %19 = sbr.rel (0) target = $region13
    $region12: #{tpu_custom_call.1} parent=1 // pred_region
      _
    $region13: #{tpu_custom_call.1} parent=1 // pred_fallthru
      _
    // Predicated region
    $region14: #{tpu_custom_call.1} parent=1 // pred_check
      _
    $region15: #{tpu_custom_call.1} parent=1 // pred_check_branch
      %21 = sbr.rel (0) target = $region17
    $region16: #{tpu_custom_call.1} parent=1 // pred_region
      _
    $region17: #{tpu_custom_call.1} parent=1 // pred_fallthru
      _
    %v22 = vld [vmem:[%s0] sm:$0xff]
    %v23 = vld [vmem:[%s0 + $0x8] sm:$0xff]
    %v24 = vld [vmem:[%s1] sm:$0xff]
    %v25 = vld [vmem:[%s1 + $0x8] sm:$0xff]
    %v26 = vld [vmem:[%s1 + $0x10] sm:$0xff]
    %v27 = vld [vmem:[%s1 + $0x18] sm:$0xff]
    %vm28 = vcmask 261120
    %v30 = vsel %vm28, %v22, 0
    %v33 = vsel %vm28, %v23, 0
    %35 = vmatprep.subr.mxu0 0.0
    %36 = vmatpush1.msra.mxu0 %v24
    %37 = vmatprep.subr.mxu0 0.0
    %38 = vmatpush1.msra.mxu0 %v25
    %39 = vmatprep.subr.mxu0 0.0
    %40 = vmatpush1.msra.mxu0 %v26
    %41 = vmatprep.subr.mxu0 0.0
    %42 = vmatpush1.msra.mxu0 %v27
    %43 = vmatprep.subr.mxu0 0.0
    %44 = vmatpush1.msra.mxu0 0.0
    %45 = vmatprep.subr.mxu0 0.0
    %46 = vmatpush1.msra.mxu0 0.0
    %47 = vmatprep.subr.mxu0 0.0
    %48 = vmatpush1.msra.mxu0 0.0
    %49 = vmatprep.subr.mxu0 0.0
    %50 = vmatpush1.msra.mxu0 0.0
    %51 = vmatprep.subr.mxu0 0.0
    %52 = vmatpush1.msra.mxu0 0.0
    %53 = vmatprep.subr.mxu0 0.0
    %54 = vmatpush1.msra.mxu0 0.0
    %55 = vmatprep.subr.mxu0 0.0
    %56 = vmatpush1.msra.mxu0 0.0
    %57 = vmatprep.subr.mxu0 0.0
    %58 = vmatpush1.msra.mxu0 0.0
    %59 = vmatprep.subr.mxu0 0.0
    %60 = vmatpush1.msra.mxu0 0.0
    %61 = vmatprep.subr.mxu0 0.0
    %62 = vmatpush1.msra.mxu0 0.0
    %63 = vmatprep.subr.mxu0 0.0
    %64 = vmatpush1.msra.mxu0 0.0
    %65 = vmatprep.subr.mxu0 0.0
    %66 = vmatpush1.msra.mxu0 0.0
    %67 = vmatprep.subr.mxu0 0.0
    %68 = vmatpush1.msra.mxu0 0.0
    %69 = vmatprep.subr.mxu0 0.0
    %70 = vmatpush1.msra.mxu0 0.0
    %71 = vmatprep.subr.mxu0 0.0
    %72 = vmatpush1.msra.mxu0 0.0
    %73 = vmatprep.subr.mxu0 0.0
    %74 = vmatpush1.msra.mxu0 0.0
    %75 = vmatprep.subr.mxu0 0.0
    %76 = vmatpush1.msra.mxu0 0.0
    %77 = vmatprep.subr.mxu0 0.0
    %78 = vmatpush1.msra.mxu0 0.0
    %79 = vmatprep.subr.mxu0 0.0
    %80 = vmatpush1.msra.mxu0 0.0
    %81 = vmatprep.subr.mxu0 0.0
    %82 = vmatpush1.msra.mxu0 0.0
    %83 = vmatprep.subr.mxu0 0.0
    %84 = vmatpush1.msra.mxu0 0.0
    %85 = vmatprep.subr.mxu0 0.0
    %86 = vmatpush1.msra.mxu0 0.0
    %87 = vmatprep.subr.mxu0 0.0
    %88 = vmatpush1.msra.mxu0 0.0
    %89 = vmatprep.subr.mxu0 0.0
    %90 = vmatpush1.msra.mxu0 0.0
    %91 = vmatprep.subr.mxu0 0.0
    %92 = vmatpush1.msra.mxu0 0.0
    %93 = vmatprep.subr.mxu0 0.0
    %94 = vmatpush1.msra.mxu0 0.0
    %95 = vmatprep.subr.mxu0 0.0
    %96 = vmatpush1.msra.mxu0 0.0
    %97 = vmatprep.subr.mxu0 0.0
    %98 = vmatpush1.msra.mxu0 0.0
    %99 = vmatprep.mubr.f32.mxu0 0.0
    %100 = vmatmul.mubr.f32.gmra.mrb[0].mxu0 %v30
    %v101 = vpop.f32.mrb[0].mxu0
    %v102 = vadd.f32 0.0, %v101
    %v103 = vpop.f32.mrb[0].mxu0
    %104 = vmatprep.mubr.f32.mxu0 0.0
    %105 = vmatmul.mubr.f32.gmra.mrb[0].mxu0 %v33
    %v106 = vpop.f32.mrb[0].mxu0
    %v107 = vadd.f32 0.0, %v106
    %v108 = vpop.f32.mrb[0].mxu0
    %109 = vdwg.mxu0
    %v110 = vmul.f32 %v102, 0.25
    %v111 = vmul.f32 %v107, 0.25
    %v112 = vld [vmem:[%s2] sm:$0xff]
    %v113 = vld [vmem:[%s2 + $0x8] sm:$0xff]
    %v114 = vld [vmem:[%s2 + $0x10] sm:$0xff]
    %v115 = vld [vmem:[%s2 + $0x18] sm:$0xff]
    %116 = vmatprep.subr.mxu0 0.0
    %117 = vmatpush1.msra.mxu0 %v112
    %118 = vmatprep.subr.mxu0 0.0
    %119 = vmatpush1.msra.mxu0 %v113
    %120 = vmatprep.subr.mxu0 0.0
    %121 = vmatpush1.msra.mxu0 %v114
    %122 = vmatprep.subr.mxu0 0.0
    %123 = vmatpush1.msra.mxu0 %v115
    %124 = vmatprep.subr.mxu0 0.0
    %125 = vmatpush1.msra.mxu0 0.0
    %126 = vmatprep.subr.mxu0 0.0
    %127 = vmatpush1.msra.mxu0 0.0
    %128 = vmatprep.subr.mxu0 0.0
    %129 = vmatpush1.msra.mxu0 0.0
    %130 = vmatprep.subr.mxu0 0.0
    %131 = vmatpush1.msra.mxu0 0.0
    %132 = vmatprep.subr.mxu0 0.0
    %133 = vmatpush1.msra.mxu0 0.0
    %134 = vmatprep.subr.mxu0 0.0
    %135 = vmatpush1.msra.mxu0 0.0
    %136 = vmatprep.subr.mxu0 0.0
    %137 = vmatpush1.msra.mxu0 0.0
    %138 = vmatprep.subr.mxu0 0.0
    %139 = vmatpush1.msra.mxu0 0.0
    %140 = vmatprep.subr.mxu0 0.0
    %141 = vmatpush1.msra.mxu0 0.0
    %142 = vmatprep.subr.mxu0 0.0
    %143 = vmatpush1.msra.mxu0 0.0
    %144 = vmatprep.subr.mxu0 0.0
    %145 = vmatpush1.msra.mxu0 0.0
    %146 = vmatprep.subr.mxu0 0.0
    %147 = vmatpush1.msra.mxu0 0.0
    %148 = vmatprep.subr.mxu0 0.0
    %149 = vmatpush1.msra.mxu0 0.0
    %150 = vmatprep.subr.mxu0 0.0
    %151 = vmatpush1.msra.mxu0 0.0
    %152 = vmatprep.subr.mxu0 0.0
    %153 = vmatpush1.msra.mxu0 0.0
    %154 = vmatprep.subr.mxu0 0.0
    %155 = vmatpush1.msra.mxu0 0.0
    %156 = vmatprep.subr.mxu0 0.0
    %157 = vmatpush1.msra.mxu0 0.0
    %158 = vmatprep.subr.mxu0 0.0
    %159 = vmatpush1.msra.mxu0 0.0
    %160 = vmatprep.subr.mxu0 0.0
    %161 = vmatpush1.msra.mxu0 0.0
    %162 = vmatprep.subr.mxu0 0.0
    %163 = vmatpush1.msra.mxu0 0.0
    %164 = vmatprep.subr.mxu0 0.0
    %165 = vmatpush1.msra.mxu0 0.0
    %166 = vmatprep.subr.mxu0 0.0
    %167 = vmatpush1.msra.mxu0 0.0
    %168 = vmatprep.subr.mxu0 0.0
    %169 = vmatpush1.msra.mxu0 0.0
    %170 = vmatprep.subr.mxu0 0.0
    %171 = vmatpush1.msra.mxu0 0.0
    %172 = vmatprep.subr.mxu0 0.0
    %173 = vmatpush1.msra.mxu0 0.0
    %174 = vmatprep.subr.mxu0 0.0
    %175 = vmatpush1.msra.mxu0 0.0
    %176 = vmatprep.subr.mxu0 0.0
    %177 = vmatpush1.msra.mxu0 0.0
    %178 = vmatprep.subr.mxu0 0.0
    %179 = vmatpush1.msra.mxu0 0.0
    %180 = vmatprep.mubr.f32.mxu0 0.0
    %181 = vmatmul.mubr.f32.gmra.mrb[0].mxu0 %v30
    %v182 = vpop.f32.mrb[0].mxu0
    %v183 = vadd.f32 0.0, %v182
    %v184 = vpop.f32.mrb[0].mxu0
    %185 = vmatprep.mubr.f32.mxu0 0.0
    %186 = vmatmul.mubr.f32.gmra.mrb[0].mxu0 %v33
    %v187 = vpop.f32.mrb[0].mxu0
    %v188 = vadd.f32 0.0, %v187
    %v189 = vpop.f32.mrb[0].mxu0
    %190 = vdwg.mxu0
    %v191 = vld [vmem:[%s3] sm:$0xff]
    %v192 = vld [vmem:[%s3 + $0x8] sm:$0xff]
    %v193 = vld [vmem:[%s3 + $0x10] sm:$0xff]
    %v194 = vld [vmem:[%s3 + $0x18] sm:$0xff]
    %195 = vmatprep.subr.mxu0 0.0
    %196 = vmatpush1.msra.mxu0 %v191
    %197 = vmatprep.subr.mxu0 0.0
    %198 = vmatpush1.msra.mxu0 %v192
    %199 = vmatprep.subr.mxu0 0.0
    %200 = vmatpush1.msra.mxu0 %v193
    %201 = vmatprep.subr.mxu0 0.0
    %202 = vmatpush1.msra.mxu0 %v194
    %203 = vmatprep.subr.mxu0 0.0
    %204 = vmatpush1.msra.mxu0 0.0
    %205 = vmatprep.subr.mxu0 0.0
    %206 = vmatpush1.msra.mxu0 0.0
    %207 = vmatprep.subr.mxu0 0.0
    %208 = vmatpush1.msra.mxu0 0.0
    %209 = vmatprep.subr.mxu0 0.0
    %210 = vmatpush1.msra.mxu0 0.0
    %211 = vmatprep.subr.mxu0 0.0
    %212 = vmatpush1.msra.mxu0 0.0
    %213 = vmatprep.subr.mxu0 0.0
    %214 = vmatpush1.msra.mxu0 0.0
    %215 = vmatprep.subr.mxu0 0.0
    %216 = vmatpush1.msra.mxu0 0.0
    %217 = vmatprep.subr.mxu0 0.0
    %218 = vmatpush1.msra.mxu0 0.0
    %219 = vmatprep.subr.mxu0 0.0
    %220 = vmatpush1.msra.mxu0 0.0
    %221 = vmatprep.subr.mxu0 0.0
    %222 = vmatpush1.msra.mxu0 0.0
    %223 = vmatprep.subr.mxu0 0.0
    %224 = vmatpush1.msra.mxu0 0.0
    %225 = vmatprep.subr.mxu0 0.0
    %226 = vmatpush1.msra.mxu0 0.0
    %227 = vmatprep.subr.mxu0 0.0
    %228 = vmatpush1.msra.mxu0 0.0
    %229 = vmatprep.subr.mxu0 0.0
    %230 = vmatpush1.msra.mxu0 0.0
    %231 = vmatprep.subr.mxu0 0.0
    %232 = vmatpush1.msra.mxu0 0.0
    %233 = vmatprep.subr.mxu0 0.0
    %234 = vmatpush1.msra.mxu0 0.0
    %235 = vmatprep.subr.mxu0 0.0
    %236 = vmatpush1.msra.mxu0 0.0
    %237 = vmatprep.subr.mxu0 0.0
    %238 = vmatpush1.msra.mxu0 0.0
    %239 = vmatprep.subr.mxu0 0.0
    %240 = vmatpush1.msra.mxu0 0.0
    %241 = vmatprep.subr.mxu0 0.0
    %242 = vmatpush1.msra.mxu0 0.0
    %243 = vmatprep.subr.mxu0 0.0
    %244 = vmatpush1.msra.mxu0 0.0
    %245 = vmatprep.subr.mxu0 0.0
    %246 = vmatpush1.msra.mxu0 0.0
    %247 = vmatprep.subr.mxu0 0.0
    %248 = vmatpush1.msra.mxu0 0.0
    %249 = vmatprep.subr.mxu0 0.0
    %250 = vmatpush1.msra.mxu0 0.0
    %251 = vmatprep.subr.mxu0 0.0
    %252 = vmatpush1.msra.mxu0 0.0
    %253 = vmatprep.subr.mxu0 0.0
    %254 = vmatpush1.msra.mxu0 0.0
    %255 = vmatprep.subr.mxu0 0.0
    %256 = vmatpush1.msra.mxu0 0.0
    %257 = vmatprep.subr.mxu0 0.0
    %258 = vmatpush1.msra.mxu0 0.0
    %259 = vmatprep.mubr.f32.mxu0 0.0
    %260 = vmatmul.mubr.f32.gmra.mrb[0].mxu0 %v30
    %v261 = vpop.f32.mrb[0].mxu0
    %v262 = vadd.f32 0.0, %v261
    %v263 = vpop.f32.mrb[0].mxu0
    %264 = vmatprep.mubr.f32.mxu0 0.0
    %265 = vmatmul.mubr.f32.gmra.mrb[0].mxu0 %v33
    %v266 = vpop.f32.mrb[0].mxu0
    %v267 = vadd.f32 0.0, %v266
    %v268 = vpop.f32.mrb[0].mxu0
    %269 = vdwg.mxu0
    %vm270 = vcmask 130048
    %271 = vst.msk [vmem:[#allocation2] sm:$0xff] %vm270, %v110
    %272 = vst.msk [vmem:[#allocation2 + $0x8] sm:$0xff] %vm270, %v111
    %273 = vst.msk [vmem:[#allocation4] sm:$0xff] %vm270, %v183
    %274 = vst.msk [vmem:[#allocation4 + $0x8] sm:$0xff] %vm270, %v188
    %275 = vst.msk [vmem:[#allocation6] sm:$0xff] %vm270, %v262
    %276 = vst.msk [vmem:[#allocation6 + $0x8] sm:$0xff] %vm270, %v267
    // Predicated region
    $region18: #{tpu_custom_call.1} parent=1 // pred_check
      _
    $region19: #{tpu_custom_call.1} parent=1 // pred_check_branch
      %278 = sbr.rel (0) target = $region21
    $region20: #{tpu_custom_call.1} parent=1 // pred_region
      %s280 = ssub.s32 256, 256
      %281 = vsyncadd [#allocation3], %s280
      %s282 = sshll.u32 [#allocation2], 4
      %s283 = int_to_ptr.vmem [resolvable:$true] %s282
      %288 = dma.vmem_to_hbm [thread:$0]  %s283, 256, %s4, [#allocation3], 128, 128, 8
    $region21: #{tpu_custom_call.1} parent=1 // pred_fallthru
      _
    // Predicated region
    $region22: #{tpu_custom_call.1} parent=1 // pred_check
      _
    $region23: #{tpu_custom_call.1} parent=1 // pred_check_branch
      %290 = sbr.rel (0) target = $region25
    $region24: #{tpu_custom_call.1} parent=1 // pred_region
      %s292 = ssub.s32 256, 256
      %293 = vsyncadd [#allocation5], %s292
      %s294 = sshll.u32 [#allocation4], 4
      %s295 = int_to_ptr.vmem [resolvable:$true] %s294
      %300 = dma.vmem_to_hbm [thread:$0]  %s295, 256, %s5, [#allocation5], 128, 128, 8
    $region25: #{tpu_custom_call.1} parent=1 // pred_fallthru
      _
    // Predicated region
    $region26: #{tpu_custom_call.1} parent=1 // pred_check
      _
    $region27: #{tpu_custom_call.1} parent=1 // pred_check_branch
      %302 = sbr.rel (0) target = $region29
    $region28: #{tpu_custom_call.1} parent=1 // pred_region
      %s304 = ssub.s32 256, 256
      %305 = vsyncadd [#allocation5], %s304
      %s306 = sshll.u32 [#allocation6], 4
      %s307 = int_to_ptr.vmem [resolvable:$true] %s306
      %312 = dma.vmem_to_hbm [thread:$0]  %s307, 256, %s6, [#allocation5], 128, 128, 8
    $region29: #{tpu_custom_call.1} parent=1 // pred_fallthru
      _
    // Predicated region
    $region30: #{tpu_custom_call.1} parent=1 // pred_check
      _
    $region31: #{tpu_custom_call.1} parent=1 // pred_check_branch
      %314 = sbr.rel (0) target = $region33
    $region32: #{tpu_custom_call.1} parent=1 // pred_region
      %315 = dma.done [#allocation3], 256
    $region33: #{tpu_custom_call.1} parent=1 // pred_fallthru
      _
    // Predicated region
    $region34: #{tpu_custom_call.1} parent=1 // pred_check
      _
    $region35: #{tpu_custom_call.1} parent=1 // pred_check_branch
      %317 = sbr.rel (0) target = $region37
    $region36: #{tpu_custom_call.1} parent=1 // pred_region
      %318 = dma.done [#allocation5], 256
    $region37: #{tpu_custom_call.1} parent=1 // pred_fallthru
      _
    // Predicated region
    $region38: #{tpu_custom_call.1} parent=1 // pred_check
      _
    $region39: #{tpu_custom_call.1} parent=1 // pred_check_branch
      %320 = sbr.rel (0) target = $region41
    $region40: #{tpu_custom_call.1} parent=1 // pred_region
      %321 = dma.done [#allocation5], 256
    $region41: #{tpu_custom_call.1} parent=1 // pred_fallthru
      _
    %322 = vsyncpa [#allocation3], 1
    %323 = vsyncpa [#allocation5], 1

</llo_original>
